<compile_context>
chip_gen: v7x
topology: tpu7x:2x2x1
jax: 0.10.0
libtpu: 0.0.40
codegen_flags: <defaults>
</compile_context>

<pallas_src>
import functools
import math

import jax
import jax.numpy as jnp
from jax.experimental import pallas as pl
from jax.experimental.pallas import tpu as pltpu


# ============================================================================
# In-kernel helpers
# ============================================================================
def _sigmoid(x):
    return 1.0 / (1.0 + jnp.exp(-x))


def _bn_silu(h, gamma, beta, eps=1e-5):
    """nn.BatchNorm1d (training mode: batch statistics, biased variance) + SiLU."""
    mean = jnp.mean(h, axis=0, keepdims=True)
    var = jnp.mean((h - mean) * (h - mean), axis=0, keepdims=True)
    hn = (h - mean) * jax.lax.rsqrt(var + eps) * gamma + beta
    return hn * _sigmoid(hn)


def _fmix32(v):
    """lowbias32 integer mixer: xor/shift/multiply only (VPU friendly, portable)."""
    v = v ^ (v >> 16)
    v = v * jnp.uint32(0x7FEB352D)
    v = v ^ (v >> 15)
    v = v * jnp.uint32(0x846CA68B)
    v = v ^ (v >> 16)
    return v


# ============================================================================
# expand: Embedding -> (BN + SiLU -> Linear)x3 -> Sigmoid          (one fused kernel)
# ============================================================================
def _expand_kernel(msg_ref, emb_ref, g1, b1, w1, c1, g2, b2, w2, c2, g3, b3,
                   w3, c3, out_ref, *, msg_size):
    B = msg_ref.shape[0]
    # Embedding lookup as a one-hot matmul (MXU friendly, no gather needed).
    onehot = (jax.lax.broadcasted_iota(jnp.int32, (B, msg_size), 1)
              == msg_ref[...]).astype(jnp.float32)                       # (B, msg)
    h = jnp.dot(onehot, emb_ref[...], preferred_element_type=jnp.float32)  # (B, 32)
    h = _bn_silu(h, g1[...], b1[...])
    h = jnp.dot(h, w1[...], preferred_element_type=jnp.float32) + c1[...]
    h = _bn_silu(h, g2[...], b2[...])
    h = jnp.dot(h, w2[...], preferred_element_type=jnp.float32) + c2[...]
    h = _bn_silu(h, g3[...], b3[...])
    h = jnp.dot(h, w3[...], preferred_element_type=jnp.float32) + c3[...]
    out_ref[...] = _sigmoid(h)                                           # (B, img_size)


def expand_forward(params, msg, msg_size, img_size):
    B = msg.shape[0]
    g1, b1 = params["e_bn1"]; w1, c1 = params["e_l1"]
    g2, b2 = params["e_bn2"]; w2, c2 = params["e_l2"]
    g3, b3 = params["e_bn3"]; w3, c3 = params["e_l3"]
    kernel = functools.partial(_expand_kernel, msg_size=msg_size)
    return pl.pallas_call(
        kernel,
        out_shape=jax.ShapeDtypeStruct((B, img_size), jnp.float32),
    )(msg.reshape(B, 1).astype(jnp.int32), params["emb"],
      g1, b1, w1, c1, g2, b2, w2, c2, g3, b3, w3, c3)


# ============================================================================
# squeeze: (Linear -> BN -> SiLU)x3 -> Linear                      (one fused kernel)
# ============================================================================
def _squeeze_kernel(x_ref, w1, c1, g1, b1, w2, c2, g2, b2, w3, c3, g3, b3,
                    w4, c4, out_ref):
    h = jnp.dot(x_ref[...], w1[...], preferred_element_type=jnp.float32) + c1[...]
    h = _bn_silu(h, g1[...], b1[...])
    h = jnp.dot(h, w2[...], preferred_element_type=jnp.float32) + c2[...]
    h = _bn_silu(h, g2[...], b2[...])
    h = jnp.dot(h, w3[...], preferred_element_type=jnp.float32) + c3[...]
    h = _bn_silu(h, g3[...], b3[...])
    out_ref[...] = jnp.dot(h, w4[...], preferred_element_type=jnp.float32) + c4[...]


def squeeze_forward(params, x_flat, msg_size):
    B = x_flat.shape[0]
    w1, c1 = params["s_l1"]; g1, b1 = params["s_bn1"]
    w2, c2 = params["s_l2"]; g2, b2 = params["s_bn2"]
    w3, c3 = params["s_l3"]; g3, b3 = params["s_bn3"]
    w4, c4 = params["s_l4"]
    return pl.pallas_call(
        _squeeze_kernel,
        out_shape=jax.ShapeDtypeStruct((B, msg_size), jnp.float32),
    )(x_flat, w1, c1, g1, b1, w2, c2, g2, b2, w3, c3, g3, b3, w4, c4)


# ============================================================================
# Noise: perspective/affine warp + (randn + 1)
# ============================================================================
def _noise_kernel(seed_ref, mat_ref, coord_ref, x_ref, o_ref, *, H, W):
    """Grid = (batch, dst-pixel tiles).

    seed_ref  : (B,)    int32  SMEM (scalar prefetch)  per-batch noise seed
    mat_ref   : (B*9,)  f32    SMEM (flat 1-D)         dst->src homographies
    coord_ref : (2, T)  f32    VMEM                    dst xd / yd for this tile
    x_ref     : (C, N)  f32    VMEM                    full source image (flattened)
    o_ref     : (C, T)  f32    VMEM                    output tile
    """
    b = pl.program_id(0)
    t = pl.program_id(1)
    C, N = x_ref.shape
    T = o_ref.shape[-1]

    # --- dst -> src homography scalars for this batch element
    base = b * 9
    m00 = mat_ref[base + 0]; m01 = mat_ref[base + 1]; m02 = mat_ref[base + 2]
    m10 = mat_ref[base + 3]; m11 = mat_ref[base + 4]; m12 = mat_ref[base + 5]
    m20 = mat_ref[base + 6]; m21 = mat_ref[base + 7]; m22 = mat_ref[base + 8]

    # --- dst pixel coordinates (precomputed in the wrapper; no int div/mod here)
    xd = coord_ref[0:1, :]                                           # (1, T)
    yd = coord_ref[1:2, :]                                           # (1, T)

    Xs = m00 * xd + m01 * yd + m02
    Ys = m10 * xd + m11 * yd + m12
    Zs = m20 * xd + m21 * yd + m22
    # Guard the perspective divide: clamp Zs away from 0 and clip coordinates so
    # the int32 conversion below is always well defined (no NaN/Inf poisoning).
    eps = 1e-6
    Zs = jnp.where(jnp.abs(Zs) < eps, jnp.where(Zs >= 0.0, eps, -eps), Zs)
    sx = jnp.clip(Xs / Zs, -4.0, W + 4.0)
    sy = jnp.clip(Ys / Zs, -4.0, H + 4.0)

    x0f = jnp.floor(sx); y0f = jnp.floor(sy)
    wx = sx - x0f;       wy = sy - y0f
    x0 = x0f.astype(jnp.int32); y0 = y0f.astype(jnp.int32)
    x1 = x0 + 1;                 y1 = y0 + 1

    # --- separable bilinear one-hots.  Out-of-range corner indices never match the
    # iota, so zero padding comes for free (no extra validity masks / selects).
    y_iota = jax.lax.broadcasted_iota(jnp.int32, (H, 1, T), 0)
    x_iota = jax.lax.broadcasted_iota(jnp.int32, (1, W, T), 1)
    Ay = (jnp.where(y_iota == y0, 1.0 - wy, 0.0)
          + jnp.where(y_iota == y1, wy, 0.0))                        # (H, 1, T)
    Ax = (jnp.where(x_iota == x0, 1.0 - wx, 0.0)
          + jnp.where(x_iota == x1, wx, 0.0))                        # (1, W, T)
    # G[y*W + x, t] = Ay[y, t] * Ax[x, t]  -- ONE (N, T) multiply instead of four
    # full compare/select passes.  (W is a multiple of 8 -> layout-friendly merge.)
    G = (Ay * Ax).reshape(N, T).astype(jnp.bfloat16)                 # (N, T)

    # --- warp on the MXU (bf16 inputs, f32 accumulation)
    warped = jnp.dot(x_ref[...].astype(jnp.bfloat16), G,
                     preferred_element_type=jnp.float32)             # (C, T)

    # --- additive noise ~ N(0,1) + 1: portable integer hash + Irwin-Hall(8) sum
    # (no transcendentals, no TPU-only PRNG primitives -> also runs in interpret mode).
    seed = seed_ref[b].astype(jnp.uint32) * jnp.uint32(0x9E3779B9)
    c_iota = jax.lax.broadcasted_iota(jnp.int32, (C, T), 0)
    l_iota = jax.lax.broadcasted_iota(jnp.int32, (C, T), 1)
    key = (c_iota * N + l_iota + t * T).astype(jnp.uint32) + seed
    h1 = _fmix32(key)
    h2 = _fmix32(key ^ jnp.uint32(0x85EBCA6B))

    def _byte_sum(v):
        m = jnp.uint32(0xFF)
        return (v & m) + ((v >> 8) & m) + ((v >> 16) & m) + (v >> 24)

    s = (_byte_sum(h1) + _byte_sum(h2)).astype(jnp.int32).astype(jnp.float32)
    gauss = (s - 1020.0) * (1.0 / 209.0215)   # sum of 8 byte-uniforms -> ~N(0, 1)

    o_ref[...] = (warped + gauss + 1.0).astype(o_ref.dtype)


def _pick_dst_tile(n):
    for t in (2048, 1024, 512, 256, 128):
        if n % t == 0:
            return t
    return n


def noise_forward(x, mats_flat, seeds):
    """x: (B,C,H,W) f32; mats_flat: (B*9,) f32 dst->src homographies; seeds: (B,) i32."""
    B, C, H, W = x.shape
    N = H * W
    T = _pick_dst_tile(N)                      # dst tile -> VMEM is O(N*T), not O(N^2)
    x_flat = x.reshape(B, C, N)

    n = jnp.arange(N, dtype=jnp.int32)
    coords = jnp.stack([(n % W).astype(jnp.float32),
                        (n // W).astype(jnp.float32)], axis=0)       # (2, N)

    kernel = functools.partial(_noise_kernel, H=H, W=W)
    out_flat = pl.pallas_call(
        kernel,
        out_shape=jax.ShapeDtypeStruct((B, C, N), x.dtype),
        grid_spec=pltpu.PrefetchScalarGridSpec(
            num_scalar_prefetch=1,                                    # seeds -> SMEM
            grid=(B, N // T),
            in_specs=[
                pl.BlockSpec(memory_space=pltpu.MemorySpace.SMEM),    # mats_flat (B*9,)
                pl.BlockSpec((2, T), lambda b, t, seeds: (0, t)),     # dst coords tile
                pl.BlockSpec((None, C, N), lambda b, t, seeds: (b, 0, 0)),  # full src
            ],
            out_specs=pl.BlockSpec((None, C, T), lambda b, t, seeds: (b, 0, t)),
        ),
        compiler_params=pltpu.CompilerParams(
            dimension_semantics=("parallel", "parallel"),             # batch + dst tiles
            vmem_limit_bytes=32 * 1024 * 1024,
        ),
    )(seeds, mats_flat, coords, x_flat)
    return out_flat.reshape(B, C, H, W)


# ============================================================================
# Full DenseIAE forward
# ============================================================================
def dense_iae_forward(params, msg, mats_flat, seeds, img_shape, msg_size):
    C, H, W = img_shape
    B = msg.shape[0]
    img_size = C * H * W
    pred_img_flat = expand_forward(params, msg, msg_size, img_size)   # (B, img_size)
    pred_img = pred_img_flat.reshape(B, C, H, W)
    noise_img = noise_forward(pred_img, mats_flat, seeds)             # (B, C, H, W)
    pred_msg = squeeze_forward(params, noise_img.reshape(B, img_size), msg_size)
    return pred_msg, pred_img


# ============================================================================
# Parameter init (plain-JAX glue; Linear weights stored as (in, out))
# ============================================================================
def init_params(key, msg_size, img_shape):
    C, H, W = img_shape
    img_size = C * H * W
    ks = jax.random.split(key, 8)

    def lin(k, fan_in, fan_out):
        lim = 1.0 / math.sqrt(fan_in)
        kw, kb = jax.random.split(k)
        w = jax.random.uniform(kw, (fan_in, fan_out), jnp.float32, -lim, lim)
        b = jax.random.uniform(kb, (1, fan_out), jnp.float32, -lim, lim)
        return w, b

    def bn(f):
        return jnp.ones((1, f), jnp.float32), jnp.zeros((1, f), jnp.float32)

    return {
        "emb": jax.random.normal(ks[0], (msg_size, 32), jnp.float32),
        "e_bn1": bn(32), "e_l1": lin(ks[1], 32, 64),
        "e_bn2": bn(64), "e_l2": lin(ks[2], 64, 64),
        "e_bn3": bn(64), "e_l3": lin(ks[3], 64, img_size),
        "s_l1": lin(ks[4], img_size, 64), "s_bn1": bn(64),
        "s_l2": lin(ks[5], 64, 64),       "s_bn2": bn(64),
        "s_l3": lin(ks[6], 64, 64),       "s_bn3": bn(64),
        "s_l4": lin(ks[7], 64, msg_size),
    }


# ============================================================================
# Random affine + perspective parameter sampling (plain-JAX glue).
# TODO(synk): kornia's exact normalized-coordinate / align_corners convention and the
# PyTorch RNG stream are not reproduced bit-exactly; equivalent random transforms are
# sampled deterministically in JAX instead.
# ============================================================================
def _bmat3(rows):
    return jnp.stack([jnp.stack(r, axis=-1) for r in rows], axis=-2)


def _get_perspective_transform(src, dst):
    B = src.shape[0]
    x, y = src[..., 0], src[..., 1]
    X, Y = dst[..., 0], dst[..., 1]
    zeros = jnp.zeros_like(x)
    ones = jnp.ones_like(x)
    ax = jnp.stack([x, y, ones, zeros, zeros, zeros, -x * X, -y * X], axis=-1)
    ay = jnp.stack([zeros, zeros, zeros, x, y, ones, -x * Y, -y * Y], axis=-1)
    A = jnp.concatenate([ax, ay], axis=1)
    bvec = jnp.concatenate([X, Y], axis=1)
    h = jnp.linalg.solve(A, bvec[..., None])[..., 0]
    return jnp.concatenate([h, jnp.ones((B, 1))], axis=-1).reshape(B, 3, 3)


def make_dst_to_src_mats(key, B, H, W):
    k_deg, k_tr, k_sc, k_sh, k_per = jax.random.split(key, 5)
    z = jnp.zeros((B,), jnp.float32)
    o = jnp.ones((B,), jnp.float32)

    deg = jax.random.uniform(k_deg, (B,), minval=-20.0, maxval=20.0) * (jnp.pi / 180.0)
    tr = jax.random.uniform(k_tr, (B, 2), minval=-0.1, maxval=0.1) * jnp.array([W, H], jnp.float32)
    sc = jax.random.uniform(k_sc, (B,), minval=0.9, maxval=1.1)
    sh = jax.random.uniform(k_sh, (B, 2), minval=-2.0, maxval=2.0) * (jnp.pi / 180.0)

    c, s = jnp.cos(deg), jnp.sin(deg)
    tx, ty = tr[:, 0], tr[:, 1]
    shx, shy = jnp.tan(sh[:, 0]), jnp.tan(sh[:, 1])
    cx = jnp.full((B,), (W - 1) / 2.0, jnp.float32)
    cy = jnp.full((B,), (H - 1) / 2.0, jnp.float32)

    R = _bmat3([[c, -s, z], [s, c, z], [z, z, o]])
    Sh = _bmat3([[o, shx, z], [shy, o, z], [z, z, o]])
    Sc = _bmat3([[sc, z, z], [z, sc, z], [z, z, o]])
    Tc = _bmat3([[o, z, cx], [z, o, cy], [z, z, o]])
    Tt = _bmat3([[o, z, tx], [z, o, ty], [z, z, o]])
    Tn = _bmat3([[o, z, -cx], [z, o, -cy], [z, z, o]])
    A_aff = Tc @ Tt @ R @ Sh @ Sc @ Tn

    corners = jnp.array([[0.0, 0.0], [W - 1.0, 0.0],
                         [W - 1.0, H - 1.0], [0.0, H - 1.0]], jnp.float32)
    offs = jax.random.uniform(k_per, (B, 4, 2), minval=-0.25, maxval=0.25) \
        * jnp.array([W, H], jnp.float32)
    src_pts = jnp.broadcast_to(corners, (B, 4, 2))
    dst_pts = src_pts + offs
    P = _get_perspective_transform(src_pts, dst_pts)

    M_fwd = P @ A_aff
    M_inv = jnp.linalg.inv(M_fwd)                     # dst -> src sampling matrices
    return M_inv.reshape(B * 9).astype(jnp.float32)   # flat 1-D (no 2-D SMEM padding)


# ============================================================================
# Demo
# ============================================================================
if __name__ == "__main__":
    B, C, H, W = 2, 4, 16, 16
    msg_size = 16
    img_shape = (C, H, W)

    key = jax.random.PRNGKey(0)
    k_params, k_msg, k_warp = jax.random.split(key, 3)

    params = init_params(k_params, msg_size, img_shape)
    msg = jax.random.randint(k_msg, (B,), 0, msg_size, dtype=jnp.int32)
    mats_flat = make_dst_to_src_mats(k_warp, B, H, W)        # (B*9,)
    seeds = jnp.arange(B, dtype=jnp.int32) + 12345           # distinct per-batch seeds

    pred_msg, pred_img = dense_iae_forward(params, msg, mats_flat, seeds,
                                           img_shape, msg_size)
    pred_msg, pred_img = jax.block_until_ready((pred_msg, pred_img))

    assert pred_msg.shape == (B, msg_size) and pred_msg.dtype == jnp.float32
    assert pred_img.shape == (B, C, H, W) and pred_img.dtype == jnp.float32
    assert bool(jnp.all(jnp.isfinite(pred_msg)))
    assert bool(jnp.all(jnp.isfinite(pred_img)))
    print("KERNEL_OK")
</pallas_src>

<mosaic_0001>
module attributes {stable_mosaic.version = 11 : i64} {
  func.func @_expand_kernel(%arg0: memref<2x1xi32, #tpu.memory_space<vmem>>, %arg1: memref<16x32xf32, #tpu.memory_space<vmem>>, %arg2: memref<1x32xf32, #tpu.memory_space<vmem>>, %arg3: memref<1x32xf32, #tpu.memory_space<vmem>>, %arg4: memref<32x64xf32, #tpu.memory_space<vmem>>, %arg5: memref<1x64xf32, #tpu.memory_space<vmem>>, %arg6: memref<1x64xf32, #tpu.memory_space<vmem>>, %arg7: memref<1x64xf32, #tpu.memory_space<vmem>>, %arg8: memref<64x64xf32, #tpu.memory_space<vmem>>, %arg9: memref<1x64xf32, #tpu.memory_space<vmem>>, %arg10: memref<1x64xf32, #tpu.memory_space<vmem>>, %arg11: memref<1x64xf32, #tpu.memory_space<vmem>>, %arg12: memref<64x1024xf32, #tpu.memory_space<vmem>>, %arg13: memref<1x1024xf32, #tpu.memory_space<vmem>>, %arg14: memref<2x1024xf32, #tpu.memory_space<vmem>>) attributes {dimension_semantics = [], scalar_prefetch = 0 : i64, scratch_operands = 0 : i64, tpu.core_type = #tpu.core_type<tc>} {
    %0 = tpu.iota {dimensions = array<i32: 1>} : vector<2x16xi32>
    %c0 = arith.constant 0 : index
    %c0_0 = arith.constant 0 : index
    %1 = vector.load %arg0[%c0, %c0_0] : memref<2x1xi32, #tpu.memory_space<vmem>>, vector<2x1xi32>
    %2 = vector.broadcast %1 : vector<2x1xi32> to vector<2x16xi32>
    %3 = arith.cmpi eq, %0, %2 : vector<2x16xi32>
    %4 = arith.extui %3 : vector<2x16xi1> to vector<2x16xi32>
    %5 = arith.sitofp %4 : vector<2x16xi32> to vector<2x16xf32>
    %c0_1 = arith.constant 0 : index
    %c0_2 = arith.constant 0 : index
    %6 = vector.load %arg1[%c0_1, %c0_2] : memref<16x32xf32, #tpu.memory_space<vmem>>, vector<16x32xf32>
    %cst = arith.constant dense<0.000000e+00> : vector<2x32xf32>
    %7 = tpu.matmul %5, %6, %cst {dimension_numbers = #tpu.dot_dimension_numbers<[1], [0], [0], [1], [0, 0, 1, 1], [], []>} : vector<2x16xf32>, vector<16x32xf32>, vector<2x32xf32> -> vector<2x32xf32>
    %c0_3 = arith.constant 0 : index
    %c0_4 = arith.constant 0 : index
    %8 = vector.load %arg2[%c0_3, %c0_4] : memref<1x32xf32, #tpu.memory_space<vmem>>, vector<1x32xf32>
    %c0_5 = arith.constant 0 : index
    %c0_6 = arith.constant 0 : index
    %9 = vector.load %arg3[%c0_5, %c0_6] : memref<1x32xf32, #tpu.memory_space<vmem>>, vector<1x32xf32>
    %cst_7 = arith.constant dense<0.000000e+00> : vector<32xf32>
    %10 = vector.multi_reduction <add>, %7, %cst_7 [0] : vector<2x32xf32> to vector<32xf32>
    %11 = vector.shape_cast %10 : vector<32xf32> to vector<1x32xf32>
    %cst_8 = arith.constant 2.000000e+00 : f32
    %12 = vector.broadcast %cst_8 : f32 to vector<1x32xf32>
    %13 = arith.divf %11, %12 : vector<1x32xf32>
    %14 = vector.broadcast %13 : vector<1x32xf32> to vector<2x32xf32>
    %15 = arith.subf %7, %14 : vector<2x32xf32>
    %16 = vector.broadcast %13 : vector<1x32xf32> to vector<2x32xf32>
    %17 = arith.subf %7, %16 : vector<2x32xf32>
    %18 = arith.mulf %15, %17 : vector<2x32xf32>
    %cst_9 = arith.constant dense<0.000000e+00> : vector<32xf32>
    %19 = vector.multi_reduction <add>, %18, %cst_9 [0] : vector<2x32xf32> to vector<32xf32>
    %20 = vector.shape_cast %19 : vector<32xf32> to vector<1x32xf32>
    %cst_10 = arith.constant 2.000000e+00 : f32
    %21 = vector.broadcast %cst_10 : f32 to vector<1x32xf32>
    %22 = arith.divf %20, %21 : vector<1x32xf32>
    %23 = vector.broadcast %13 : vector<1x32xf32> to vector<2x32xf32>
    %24 = arith.subf %7, %23 : vector<2x32xf32>
    %cst_11 = arith.constant 9.99999974E-6 : f32
    %25 = vector.broadcast %cst_11 : f32 to vector<1x32xf32>
    %26 = arith.addf %22, %25 : vector<1x32xf32>
    %27 = math.rsqrt %26 : vector<1x32xf32>
    %28 = vector.broadcast %27 : vector<1x32xf32> to vector<2x32xf32>
    %29 = arith.mulf %24, %28 : vector<2x32xf32>
    %30 = vector.broadcast %8 : vector<1x32xf32> to vector<2x32xf32>
    %31 = arith.mulf %29, %30 : vector<2x32xf32>
    %32 = vector.broadcast %9 : vector<1x32xf32> to vector<2x32xf32>
    %33 = arith.addf %31, %32 : vector<2x32xf32>
    %cst_12 = arith.constant 0.000000e+00 : f32
    %34 = vector.broadcast %cst_12 : f32 to vector<2x32xf32>
    %35 = arith.subf %34, %33 : vector<2x32xf32>
    %36 = math.exp %35 : vector<2x32xf32>
    %cst_13 = arith.constant 1.000000e+00 : f32
    %37 = vector.broadcast %cst_13 : f32 to vector<2x32xf32>
    %38 = arith.addf %37, %36 : vector<2x32xf32>
    %cst_14 = arith.constant 1.000000e+00 : f32
    %39 = vector.broadcast %cst_14 : f32 to vector<2x32xf32>
    %40 = arith.divf %39, %38 : vector<2x32xf32>
    %41 = arith.mulf %33, %40 : vector<2x32xf32>
    %c0_15 = arith.constant 0 : index
    %c0_16 = arith.constant 0 : index
    %42 = vector.load %arg4[%c0_15, %c0_16] : memref<32x64xf32, #tpu.memory_space<vmem>>, vector<32x64xf32>
    %cst_17 = arith.constant dense<0.000000e+00> : vector<2x64xf32>
    %43 = tpu.matmul %41, %42, %cst_17 {dimension_numbers = #tpu.dot_dimension_numbers<[1], [0], [0], [1], [0, 0, 1, 1], [], []>} : vector<2x32xf32>, vector<32x64xf32>, vector<2x64xf32> -> vector<2x64xf32>
    %c0_18 = arith.constant 0 : index
    %c0_19 = arith.constant 0 : index
    %44 = vector.load %arg5[%c0_18, %c0_19] : memref<1x64xf32, #tpu.memory_space<vmem>>, vector<1x64xf32>
    %45 = vector.broadcast %44 : vector<1x64xf32> to vector<2x64xf32>
    %46 = arith.addf %43, %45 : vector<2x64xf32>
    %c0_20 = arith.constant 0 : index
    %c0_21 = arith.constant 0 : index
    %47 = vector.load %arg6[%c0_20, %c0_21] : memref<1x64xf32, #tpu.memory_space<vmem>>, vector<1x64xf32>
    %c0_22 = arith.constant 0 : index
    %c0_23 = arith.constant 0 : index
    %48 = vector.load %arg7[%c0_22, %c0_23] : memref<1x64xf32, #tpu.memory_space<vmem>>, vector<1x64xf32>
    %cst_24 = arith.constant dense<0.000000e+00> : vector<64xf32>
    %49 = vector.multi_reduction <add>, %46, %cst_24 [0] : vector<2x64xf32> to vector<64xf32>
    %50 = vector.shape_cast %49 : vector<64xf32> to vector<1x64xf32>
    %cst_25 = arith.constant 2.000000e+00 : f32
    %51 = vector.broadcast %cst_25 : f32 to vector<1x64xf32>
    %52 = arith.divf %50, %51 : vector<1x64xf32>
    %53 = vector.broadcast %52 : vector<1x64xf32> to vector<2x64xf32>
    %54 = arith.subf %46, %53 : vector<2x64xf32>
    %55 = vector.broadcast %52 : vector<1x64xf32> to vector<2x64xf32>
    %56 = arith.subf %46, %55 : vector<2x64xf32>
    %57 = arith.mulf %54, %56 : vector<2x64xf32>
    %cst_26 = arith.constant dense<0.000000e+00> : vector<64xf32>
    %58 = vector.multi_reduction <add>, %57, %cst_26 [0] : vector<2x64xf32> to vector<64xf32>
    %59 = vector.shape_cast %58 : vector<64xf32> to vector<1x64xf32>
    %cst_27 = arith.constant 2.000000e+00 : f32
    %60 = vector.broadcast %cst_27 : f32 to vector<1x64xf32>
    %61 = arith.divf %59, %60 : vector<1x64xf32>
    %62 = vector.broadcast %52 : vector<1x64xf32> to vector<2x64xf32>
    %63 = arith.subf %46, %62 : vector<2x64xf32>
    %cst_28 = arith.constant 9.99999974E-6 : f32
    %64 = vector.broadcast %cst_28 : f32 to vector<1x64xf32>
    %65 = arith.addf %61, %64 : vector<1x64xf32>
    %66 = math.rsqrt %65 : vector<1x64xf32>
    %67 = vector.broadcast %66 : vector<1x64xf32> to vector<2x64xf32>
    %68 = arith.mulf %63, %67 : vector<2x64xf32>
    %69 = vector.broadcast %47 : vector<1x64xf32> to vector<2x64xf32>
    %70 = arith.mulf %68, %69 : vector<2x64xf32>
    %71 = vector.broadcast %48 : vector<1x64xf32> to vector<2x64xf32>
    %72 = arith.addf %70, %71 : vector<2x64xf32>
    %cst_29 = arith.constant 0.000000e+00 : f32
    %73 = vector.broadcast %cst_29 : f32 to vector<2x64xf32>
    %74 = arith.subf %73, %72 : vector<2x64xf32>
    %75 = math.exp %74 : vector<2x64xf32>
    %cst_30 = arith.constant 1.000000e+00 : f32
    %76 = vector.broadcast %cst_30 : f32 to vector<2x64xf32>
    %77 = arith.addf %76, %75 : vector<2x64xf32>
    %cst_31 = arith.constant 1.000000e+00 : f32
    %78 = vector.broadcast %cst_31 : f32 to vector<2x64xf32>
    %79 = arith.divf %78, %77 : vector<2x64xf32>
    %80 = arith.mulf %72, %79 : vector<2x64xf32>
    %c0_32 = arith.constant 0 : index
    %c0_33 = arith.constant 0 : index
    %81 = vector.load %arg8[%c0_32, %c0_33] : memref<64x64xf32, #tpu.memory_space<vmem>>, vector<64x64xf32>
    %cst_34 = arith.constant dense<0.000000e+00> : vector<2x64xf32>
    %82 = tpu.matmul %80, %81, %cst_34 {dimension_numbers = #tpu.dot_dimension_numbers<[1], [0], [0], [1], [0, 0, 1, 1], [], []>} : vector<2x64xf32>, vector<64x64xf32>, vector<2x64xf32> -> vector<2x64xf32>
    %c0_35 = arith.constant 0 : index
    %c0_36 = arith.constant 0 : index
    %83 = vector.load %arg9[%c0_35, %c0_36] : memref<1x64xf32, #tpu.memory_space<vmem>>, vector<1x64xf32>
    %84 = vector.broadcast %83 : vector<1x64xf32> to vector<2x64xf32>
    %85 = arith.addf %82, %84 : vector<2x64xf32>
    %c0_37 = arith.constant 0 : index
    %c0_38 = arith.constant 0 : index
    %86 = vector.load %arg10[%c0_37, %c0_38] : memref<1x64xf32, #tpu.memory_space<vmem>>, vector<1x64xf32>
    %c0_39 = arith.constant 0 : index
    %c0_40 = arith.constant 0 : index
    %87 = vector.load %arg11[%c0_39, %c0_40] : memref<1x64xf32, #tpu.memory_space<vmem>>, vector<1x64xf32>
    %cst_41 = arith.constant dense<0.000000e+00> : vector<64xf32>
    %88 = vector.multi_reduction <add>, %85, %cst_41 [0] : vector<2x64xf32> to vector<64xf32>
    %89 = vector.shape_cast %88 : vector<64xf32> to vector<1x64xf32>
    %cst_42 = arith.constant 2.000000e+00 : f32
    %90 = vector.broadcast %cst_42 : f32 to vector<1x64xf32>
    %91 = arith.divf %89, %90 : vector<1x64xf32>
    %92 = vector.broadcast %91 : vector<1x64xf32> to vector<2x64xf32>
    %93 = arith.subf %85, %92 : vector<2x64xf32>
    %94 = vector.broadcast %91 : vector<1x64xf32> to vector<2x64xf32>
    %95 = arith.subf %85, %94 : vector<2x64xf32>
    %96 = arith.mulf %93, %95 : vector<2x64xf32>
    %cst_43 = arith.constant dense<0.000000e+00> : vector<64xf32>
    %97 = vector.multi_reduction <add>, %96, %cst_43 [0] : vector<2x64xf32> to vector<64xf32>
    %98 = vector.shape_cast %97 : vector<64xf32> to vector<1x64xf32>
    %cst_44 = arith.constant 2.000000e+00 : f32
    %99 = vector.broadcast %cst_44 : f32 to vector<1x64xf32>
    %100 = arith.divf %98, %99 : vector<1x64xf32>
    %101 = vector.broadcast %91 : vector<1x64xf32> to vector<2x64xf32>
    %102 = arith.subf %85, %101 : vector<2x64xf32>
    %cst_45 = arith.constant 9.99999974E-6 : f32
    %103 = vector.broadcast %cst_45 : f32 to vector<1x64xf32>
    %104 = arith.addf %100, %103 : vector<1x64xf32>
    %105 = math.rsqrt %104 : vector<1x64xf32>
    %106 = vector.broadcast %105 : vector<1x64xf32> to vector<2x64xf32>
    %107 = arith.mulf %102, %106 : vector<2x64xf32>
    %108 = vector.broadcast %86 : vector<1x64xf32> to vector<2x64xf32>
    %109 = arith.mulf %107, %108 : vector<2x64xf32>
    %110 = vector.broadcast %87 : vector<1x64xf32> to vector<2x64xf32>
    %111 = arith.addf %109, %110 : vector<2x64xf32>
    %cst_46 = arith.constant 0.000000e+00 : f32
    %112 = vector.broadcast %cst_46 : f32 to vector<2x64xf32>
    %113 = arith.subf %112, %111 : vector<2x64xf32>
    %114 = math.exp %113 : vector<2x64xf32>
    %cst_47 = arith.constant 1.000000e+00 : f32
    %115 = vector.broadcast %cst_47 : f32 to vector<2x64xf32>
    %116 = arith.addf %115, %114 : vector<2x64xf32>
    %cst_48 = arith.constant 1.000000e+00 : f32
    %117 = vector.broadcast %cst_48 : f32 to vector<2x64xf32>
    %118 = arith.divf %117, %116 : vector<2x64xf32>
    %119 = arith.mulf %111, %118 : vector<2x64xf32>
    %c0_49 = arith.constant 0 : index
    %c0_50 = arith.constant 0 : index
    %120 = vector.load %arg12[%c0_49, %c0_50] : memref<64x1024xf32, #tpu.memory_space<vmem>>, vector<64x1024xf32>
    %cst_51 = arith.constant dense<0.000000e+00> : vector<2x1024xf32>
    %121 = tpu.matmul %119, %120, %cst_51 {dimension_numbers = #tpu.dot_dimension_numbers<[1], [0], [0], [1], [0, 0, 1, 1], [], []>} : vector<2x64xf32>, vector<64x1024xf32>, vector<2x1024xf32> -> vector<2x1024xf32>
    %c0_52 = arith.constant 0 : index
    %c0_53 = arith.constant 0 : index
    %122 = vector.load %arg13[%c0_52, %c0_53] : memref<1x1024xf32, #tpu.memory_space<vmem>>, vector<1x1024xf32>
    %123 = vector.broadcast %122 : vector<1x1024xf32> to vector<2x1024xf32>
    %124 = arith.addf %121, %123 : vector<2x1024xf32>
    %cst_54 = arith.constant 0.000000e+00 : f32
    %125 = vector.broadcast %cst_54 : f32 to vector<2x1024xf32>
    %126 = arith.subf %125, %124 : vector<2x1024xf32>
    %127 = math.exp %126 : vector<2x1024xf32>
    %cst_55 = arith.constant 1.000000e+00 : f32
    %128 = vector.broadcast %cst_55 : f32 to vector<2x1024xf32>
    %129 = arith.addf %128, %127 : vector<2x1024xf32>
    %cst_56 = arith.constant 1.000000e+00 : f32
    %130 = vector.broadcast %cst_56 : f32 to vector<2x1024xf32>
    %131 = arith.divf %130, %129 : vector<2x1024xf32>
    %c0_57 = arith.constant 0 : index
    %c0_58 = arith.constant 0 : index
    %132 = vector.load %arg14[%c0_57, %c0_58] : memref<2x1024xf32, #tpu.memory_space<vmem>>, vector<2x1024xf32>
    tpu.vector_store %arg14[%c0_57, %c0_58], %131 {strides = array<i32>} : memref<2x1024xf32, #tpu.memory_space<vmem>>, vector<2x1024xf32>,
    return
  }
}

</mosaic_0001>

<llo_original>
// kernel: tpu_custom_call.1
$region0: #{tpu_custom_call.1}
  #allocation0 [shape = 'u32[]', space=smem, size = 0x4, offset = 0x4, fixed_abs, tag = 'smem constant byte address 0x4 - core index']
  #allocation1 [shape = 'u32[144,128]{1,0:T(1,128)}', space=vmem, size = 0x12000, scoped, tag = 'internal scratch']
  %s0 = inlined_call_operand.vmem [shape: s32[2,1], index: 0, kind: input, shape index: {}]
  %s1 = inlined_call_operand.hbm [shape: f32[16,32], index: 1, kind: input, shape index: {}]
  %s2 = inlined_call_operand.vmem [shape: f32[1,32], index: 2, kind: input, shape index: {}]
  %s3 = inlined_call_operand.vmem [shape: f32[1,32], index: 3, kind: input, shape index: {}]
  %s4 = inlined_call_operand.hbm [shape: f32[32,64], index: 4, kind: input, shape index: {}]
  %s5 = inlined_call_operand.vmem [shape: f32[1,64], index: 5, kind: input, shape index: {}]
  %s6 = inlined_call_operand.vmem [shape: f32[1,64], index: 6, kind: input, shape index: {}]
  %s7 = inlined_call_operand.vmem [shape: f32[1,64], index: 7, kind: input, shape index: {}]
  %s8 = inlined_call_operand.hbm [shape: f32[64,64], index: 8, kind: input, shape index: {}]
  %s9 = inlined_call_operand.vmem [shape: f32[1,64], index: 9, kind: input, shape index: {}]
  %s10 = inlined_call_operand.vmem [shape: f32[1,64], index: 10, kind: input, shape index: {}]
  %s11 = inlined_call_operand.vmem [shape: f32[1,64], index: 11, kind: input, shape index: {}]
  %s12 = inlined_call_operand.hbm [shape: f32[64,1024], index: 12, kind: input, shape index: {}]
  %s13 = inlined_call_operand.vmem [shape: f32[1,1024], index: 13, kind: input, shape index: {}]
  %s14 = inlined_call_operand.hbm [shape: f32[2,1024], index: 14, kind: output, shape index: {}]
  %s15 = sld [smem:[#allocation0]]
  $region82: #{tpu_custom_call.1} parent=0
    _
  %s17 = ssub.s32 1, %s15
  %s18 = scalar_select 0, %s17, %s15
  $region1: #{tpu_custom_call.1} parent=0
    #allocation2 [shape = 'u8[8192]{0}', space=vmem, size = 0x2000, scoped, tag = 'input window, operand 1, single buffered']
    #allocation3 [shape = 's32[1]{0}', space=sflag, size = 0x4, scoped, tag = 'scoped memory for tpu_custom_call.1']
    #allocation4 [shape = 's32[1]{0}', space=sflag, size = 0x4, scoped, tag = 'scoped memory for tpu_custom_call.1']
    #allocation5 [shape = 'u8[16384]{0}', space=vmem, size = 0x4000, scoped, tag = 'input window, operand 4, single buffered']
    #allocation6 [shape = 's32[1]{0}', space=sflag, size = 0x4, scoped, tag = 'scoped memory for tpu_custom_call.1']
    #allocation7 [shape = 'u8[32768]{0}', space=vmem, size = 0x8000, scoped, tag = 'input window, operand 8, single buffered']
    #allocation8 [shape = 'u8[262144]{0}', space=vmem, size = 0x40000, scoped, tag = 'input window, operand 12, single buffered']
    #allocation9 [shape = 's32[1]{0}', space=sflag, size = 0x4, scoped, tag = 'scoped memory for tpu_custom_call.1']
    #allocation10 [shape = 'u8[8192]{0}', space=vmem, size = 0x2000, scoped, tag = 'output window, operand 0, single buffered']
    %19 = vsyncpa [#allocation3], 0
    %20 = vsyncpa [#allocation6], 0
    %21 = vsyncpa [#allocation9], 0
    %22 = vsyncpa [#allocation4], 0
    // Predicated region
    $region2: #{tpu_custom_call.1} parent=1 // pred_check
      _
    $region3: #{tpu_custom_call.1} parent=1 // pred_check_branch
      %24 = sbr.rel (0) target = $region5
    $region4: #{tpu_custom_call.1} parent=1 // pred_region
      _
    $region5: #{tpu_custom_call.1} parent=1 // pred_fallthru
      _
    // Predicated region
    $region6: #{tpu_custom_call.1} parent=1 // pred_check
      _
    $region7: #{tpu_custom_call.1} parent=1 // pred_check_branch
      %26 = sbr.rel (0) target = $region9
    $region8: #{tpu_custom_call.1} parent=1 // pred_region
      %s28 = ssub.s32 256, 256
      %29 = vsyncadd [#allocation3], %s28
      %s30 = sshll.u32 [#allocation2], 4
      %s31 = int_to_ptr.vmem [resolvable:$true] %s30
      %36 = dma.hbm_to_vmem [thread:$0]  %s1, 256, %s31, [#allocation3], 128, 128, 8
    $region9: #{tpu_custom_call.1} parent=1 // pred_fallthru
      _
    // Predicated region
    $region10: #{tpu_custom_call.1} parent=1 // pred_check
      _
    $region11: #{tpu_custom_call.1} parent=1 // pred_check_branch
      %38 = sbr.rel (0) target = $region13
    $region12: #{tpu_custom_call.1} parent=1 // pred_region
      _
    $region13: #{tpu_custom_call.1} parent=1 // pred_fallthru
      _
    // Predicated region
    $region14: #{tpu_custom_call.1} parent=1 // pred_check
      _
    $region15: #{tpu_custom_call.1} parent=1 // pred_check_branch
      %40 = sbr.rel (0) target = $region17
    $region16: #{tpu_custom_call.1} parent=1 // pred_region
      _
    $region17: #{tpu_custom_call.1} parent=1 // pred_fallthru
      _
    // Predicated region
    $region18: #{tpu_custom_call.1} parent=1 // pred_check
      _
    $region19: #{tpu_custom_call.1} parent=1 // pred_check_branch
      %42 = sbr.rel (0) target = $region21
    $region20: #{tpu_custom_call.1} parent=1 // pred_region
      %s44 = ssub.s32 512, 512
      %45 = vsyncadd [#allocation6], %s44
      %s46 = sshll.u32 [#allocation5], 4
      %s47 = int_to_ptr.vmem [resolvable:$true] %s46
      %52 = dma.hbm_to_vmem [thread:$0]  %s4, 512, %s47, [#allocation6], 128, 128, 8
    $region21: #{tpu_custom_call.1} parent=1 // pred_fallthru
      _
    // Predicated region
    $region22: #{tpu_custom_call.1} parent=1 // pred_check
      _
    $region23: #{tpu_custom_call.1} parent=1 // pred_check_branch
      %54 = sbr.rel (0) target = $region25
    $region24: #{tpu_custom_call.1} parent=1 // pred_region
      _
    $region25: #{tpu_custom_call.1} parent=1 // pred_fallthru
      _
    // Predicated region
    $region26: #{tpu_custom_call.1} parent=1 // pred_check
      _
    $region27: #{tpu_custom_call.1} parent=1 // pred_check_branch
      %56 = sbr.rel (0) target = $region29
    $region28: #{tpu_custom_call.1} parent=1 // pred_region
      _
    $region29: #{tpu_custom_call.1} parent=1 // pred_fallthru
      _
    // Predicated region
    $region30: #{tpu_custom_call.1} parent=1 // pred_check
      _
    $region31: #{tpu_custom_call.1} parent=1 // pred_check_branch
      %58 = sbr.rel (0) target = $region33
    $region32: #{tpu_custom_call.1} parent=1 // pred_region
      _
    $region33: #{tpu_custom_call.1} parent=1 // pred_fallthru
      _
    // Predicated region
    $region34: #{tpu_custom_call.1} parent=1 // pred_check
      _
    $region35: #{tpu_custom_call.1} parent=1 // pred_check_branch
      %60 = sbr.rel (0) target = $region37
    $region36: #{tpu_custom_call.1} parent=1 // pred_region
      %s62 = ssub.s32 1024, 1024
      %63 = vsyncadd [#allocation6], %s62
      %s64 = sshll.u32 [#allocation7], 4
      %s65 = int_to_ptr.vmem [resolvable:$true] %s64
      %70 = dma.hbm_to_vmem [thread:$0]  %s8, 1024, %s65, [#allocation6], 128, 128, 8
    $region37: #{tpu_custom_call.1} parent=1 // pred_fallthru
      _
    // Predicated region
    $region38: #{tpu_custom_call.1} parent=1 // pred_check
      _
    $region39: #{tpu_custom_call.1} parent=1 // pred_check_branch
      %72 = sbr.rel (0) target = $region41
    $region40: #{tpu_custom_call.1} parent=1 // pred_region
      _
    $region41: #{tpu_custom_call.1} parent=1 // pred_fallthru
      _
    // Predicated region
    $region42: #{tpu_custom_call.1} parent=1 // pred_check
      _
    $region43: #{tpu_custom_call.1} parent=1 // pred_check_branch
      %74 = sbr.rel (0) target = $region45
    $region44: #{tpu_custom_call.1} parent=1 // pred_region
      _
    $region45: #{tpu_custom_call.1} parent=1 // pred_fallthru
      _
    // Predicated region
    $region46: #{tpu_custom_call.1} parent=1 // pred_check
      _
    $region47: #{tpu_custom_call.1} parent=1 // pred_check_branch
      %76 = sbr.rel (0) target = $region49
    $region48: #{tpu_custom_call.1} parent=1 // pred_region
      _
    $region49: #{tpu_custom_call.1} parent=1 // pred_fallthru
      _
    // Predicated region
    $region50: #{tpu_custom_call.1} parent=1 // pred_check
      _
    $region51: #{tpu_custom_call.1} parent=1 // pred_check_branch
      %78 = sbr.rel (0) target = $region53
    $region52: #{tpu_custom_call.1} parent=1 // pred_region
      %s80 = ssub.s32 8192, 8192
      %81 = vsyncadd [#allocation9], %s80
      %s82 = sshll.u32 [#allocation8], 4
      %s83 = int_to_ptr.vmem [resolvable:$true] %s82
      %88 = dma.hbm_to_vmem [thread:$0]  %s12, 8192, %s83, [#allocation9], 1024, 1024, 64
    $region53: #{tpu_custom_call.1} parent=1 // pred_fallthru
      _
    // Predicated region
    $region54: #{tpu_custom_call.1} parent=1 // pred_check
      _
    $region55: #{tpu_custom_call.1} parent=1 // pred_check_branch
      %90 = sbr.rel (0) target = $region57
    $region56: #{tpu_custom_call.1} parent=1 // pred_region
      _
    $region57: #{tpu_custom_call.1} parent=1 // pred_fallthru
      _
    // Predicated region
    $region58: #{tpu_custom_call.1} parent=1 // pred_check
      _
    $region59: #{tpu_custom_call.1} parent=1 // pred_check_branch
      %92 = sbr.rel (0) target = $region61
    $region60: #{tpu_custom_call.1} parent=1 // pred_region
      %93 = dma.done [#allocation3], 256
    $region61: #{tpu_custom_call.1} parent=1 // pred_fallthru
      _
    // Predicated region
    $region62: #{tpu_custom_call.1} parent=1 // pred_check
      _
    $region63: #{tpu_custom_call.1} parent=1 // pred_check_branch
      %95 = sbr.rel (0) target = $region65
    $region64: #{tpu_custom_call.1} parent=1 // pred_region
      %96 = dma.done [#allocation6], 512
    $region65: #{tpu_custom_call.1} parent=1 // pred_fallthru
      _
    // Predicated region
    $region66: #{tpu_custom_call.1} parent=1 // pred_check
      _
    $region67: #{tpu_custom_call.1} parent=1 // pred_check_branch
      %98 = sbr.rel (0) target = $region69
    $region68: #{tpu_custom_call.1} parent=1 // pred_region
      %99 = dma.done [#allocation6], 1024
    $region69: #{tpu_custom_call.1} parent=1 // pred_fallthru
      _
    // Predicated region
    $region70: #{tpu_custom_call.1} parent=1 // pred_check
      _
    $region71: #{tpu_custom_call.1} parent=1 // pred_check_branch
      %101 = sbr.rel (0) target = $region73
    $region72: #{tpu_custom_call.1} parent=1 // pred_region
      %102 = dma.done [#allocation9], 8192
    $region73: #{tpu_custom_call.1} parent=1 // pred_fallthru
      _
    %v103 = vlaneseq
    %v104 = vand.u32 %v103, 127
    %v105 = vld [vmem:[%s0] sm:$0x3]
    %106 = vset.pattern.permute.xlu0 0
    %107 = vperm.xlu0 %106, %v105
    %v108 = vpop.permute.xlu0 %107
    %vm109 = vcmp.eq.s32.totalorder %v104, %v108
    %v110 = vsel %vm109, 1, 0
    %v111 = vcvt.s32.f32 %v110
    %v112 = vld [vmem:[#allocation2] sm:$0xff]
    %v113 = vld [vmem:[#allocation2 + $0x8] sm:$0xff]
    %vm114 = vcmask 130048
    %v116 = vsel %vm114, %v111, 0
    %118 = vmatprep.subr.mxu0 0.0
    %119 = vmatpush1.msra.mxu0 %v112
    %120 = vmatprep.subr.mxu0 0.0
    %121 = vmatpush1.msra.mxu0 %v113
    %122 = vmatprep.subr.mxu0 0.0
    %123 = vmatpush1.msra.mxu0 0.0
    %124 = vmatprep.subr.mxu0 0.0
    %125 = vmatpush1.msra.mxu0 0.0
    %126 = vmatprep.subr.mxu0 0.0
    %127 = vmatpush1.msra.mxu0 0.0
    %128 = vmatprep.subr.mxu0 0.0
    %129 = vmatpush1.msra.mxu0 0.0
    %130 = vmatprep.subr.mxu0 0.0
    %131 = vmatpush1.msra.mxu0 0.0
    %132 = vmatprep.subr.mxu0 0.0
    %133 = vmatpush1.msra.mxu0 0.0
    %134 = vmatprep.subr.mxu0 0.0
    %135 = vmatpush1.msra.mxu0 0.0
    %136 = vmatprep.subr.mxu0 0.0
    %137 = vmatpush1.msra.mxu0 0.0
    %138 = vmatprep.subr.mxu0 0.0
    %139 = vmatpush1.msra.mxu0 0.0
    %140 = vmatprep.subr.mxu0 0.0
    %141 = vmatpush1.msra.mxu0 0.0
    %142 = vmatprep.subr.mxu0 0.0
    %143 = vmatpush1.msra.mxu0 0.0
    %144 = vmatprep.subr.mxu0 0.0
    %145 = vmatpush1.msra.mxu0 0.0
    %146 = vmatprep.subr.mxu0 0.0
    %147 = vmatpush1.msra.mxu0 0.0
    %148 = vmatprep.subr.mxu0 0.0
    %149 = vmatpush1.msra.mxu0 0.0
    %150 = vmatprep.subr.mxu0 0.0
    %151 = vmatpush1.msra.mxu0 0.0
    %152 = vmatprep.subr.mxu0 0.0
    %153 = vmatpush1.msra.mxu0 0.0
    %154 = vmatprep.subr.mxu0 0.0
    %155 = vmatpush1.msra.mxu0 0.0
    %156 = vmatprep.subr.mxu0 0.0
    %157 = vmatpush1.msra.mxu0 0.0
    %158 = vmatprep.subr.mxu0 0.0
    %159 = vmatpush1.msra.mxu0 0.0
    %160 = vmatprep.subr.mxu0 0.0
    %161 = vmatpush1.msra.mxu0 0.0
    %162 = vmatprep.subr.mxu0 0.0
    %163 = vmatpush1.msra.mxu0 0.0
    %164 = vmatprep.subr.mxu0 0.0
    %165 = vmatpush1.msra.mxu0 0.0
    %166 = vmatprep.subr.mxu0 0.0
    %167 = vmatpush1.msra.mxu0 0.0
    %168 = vmatprep.subr.mxu0 0.0
    %169 = vmatpush1.msra.mxu0 0.0
    %170 = vmatprep.subr.mxu0 0.0
    %171 = vmatpush1.msra.mxu0 0.0
    %172 = vmatprep.subr.mxu0 0.0
    %173 = vmatpush1.msra.mxu0 0.0
    %174 = vmatprep.subr.mxu0 0.0
    %175 = vmatpush1.msra.mxu0 0.0
    %176 = vmatprep.subr.mxu0 0.0
    %177 = vmatpush1.msra.mxu0 0.0
    %178 = vmatprep.subr.mxu0 0.0
    %179 = vmatpush1.msra.mxu0 0.0
    %180 = vmatprep.subr.mxu0 0.0
    %181 = vmatpush1.msra.mxu0 0.0
    %182 = vmatprep.mubr.f32.mxu0 0.0
    %183 = vmatmul.mubr.f32.gmra.mrb[0].mxu0 %v116
    %v184 = vpop.f32.mrb[0].mxu0
    %v185 = vadd.f32 0.0, %v184
    %v186 = vpop.f32.mrb[0].mxu0
    %187 = vdwg.mxu0
    %v188 = vld [vmem:[%s2] sm:$0x1]
    %v189 = vld [vmem:[%s3] sm:$0x1]
    %vm190 = vcmask 254976
    %v191 = vsel %vm190, %v185, 0.0
    %v192 = vrot.slane %v191, 4
    %v193 = vadd.f32 %v191, %v192
    %v194 = vrot.slane %v193, 2
    %v195 = vadd.f32 %v193, %v194
    %v196 = vrot.slane %v195, 1
    %v197 = vadd.f32 %v195, %v196
    %v198 = vrcp.pop 2.0
    %v199 = vmul.f32 %v197, %v198
    %v200 = vsub.f32 %v185, %v199
    %v201 = vmul.f32 %v200, %v200
    %v202 = vsel %vm190, %v201, 0.0
    %v203 = vrot.slane %v202, 4
    %v204 = vadd.f32 %v202, %v203
    %v205 = vrot.slane %v204, 2
    %v206 = vadd.f32 %v204, %v205
    %v207 = vrot.slane %v206, 1
    %v208 = vadd.f32 %v206, %v207
    %v209 = vmul.f32 %v208, %v198
    %v210 = vadd.f32 %v209, 1e-05
    %v211 = vrsqrt.pop %v210
    %v212 = vmul.f32 %v200, %v211
    %v214 = vlaneseq
    %v215 = vshrl.u32 %v214, 7
    %v216 = vsub.s32 0, %v215
    %v217 = vrot.slane %v188, %v216
    %v219 = vmul.f32 %v212, %v217
    %v221 = vlaneseq
    %v222 = vshrl.u32 %v221, 7
    %v223 = vsub.s32 0, %v222
    %v224 = vrot.slane %v189, %v223
    %v226 = vadd.f32 %v219, %v224
    %v227 = vsub.f32 0.0, %v226
    %v228 = vmul.f32 %v227, 1.442695
    %v229 = vpow.pop %v228
    %v230 = vadd.f32 %v229, 1.0
    %v231 = vrcp.pop %v230
    %v232 = vmul.f32 1.0, %v231
    %v233 = vmul.f32 %v226, %v232
    %v234 = vld [vmem:[#allocation5] sm:$0xff]
    %v235 = vld [vmem:[#allocation5 + $0x8] sm:$0xff]
    %v236 = vld [vmem:[#allocation5 + $0x10] sm:$0xff]
    %v237 = vld [vmem:[#allocation5 + $0x18] sm:$0xff]
    %v238 = vld [vmem:[%s5] sm:$0x1]
    %v240 = vlaneseq
    %v241 = vshrl.u32 %v240, 7
    %v242 = vsub.s32 0, %v241
    %v243 = vrot.slane %v238, %v242
    %vm245 = vcmask 261120
    %v247 = vsel %vm245, %v233, 0
    %249 = vmatprep.subr.mxu0 0.0
    %250 = vmatpush1.msra.mxu0 %v234
    %251 = vmatprep.subr.mxu0 0.0
    %252 = vmatpush1.msra.mxu0 %v235
    %253 = vmatprep.subr.mxu0 0.0
    %254 = vmatpush1.msra.mxu0 %v236
    %255 = vmatprep.subr.mxu0 0.0
    %256 = vmatpush1.msra.mxu0 %v237
    %257 = vmatprep.subr.mxu0 0.0
    %258 = vmatpush1.msra.mxu0 0.0
    %259 = vmatprep.subr.mxu0 0.0
    %260 = vmatpush1.msra.mxu0 0.0
    %261 = vmatprep.subr.mxu0 0.0
    %262 = vmatpush1.msra.mxu0 0.0
    %263 = vmatprep.subr.mxu0 0.0
    %264 = vmatpush1.msra.mxu0 0.0
    %265 = vmatprep.subr.mxu0 0.0
    %266 = vmatpush1.msra.mxu0 0.0
    %267 = vmatprep.subr.mxu0 0.0
    %268 = vmatpush1.msra.mxu0 0.0
    %269 = vmatprep.subr.mxu0 0.0
    %270 = vmatpush1.msra.mxu0 0.0
    %271 = vmatprep.subr.mxu0 0.0
    %272 = vmatpush1.msra.mxu0 0.0
    %273 = vmatprep.subr.mxu0 0.0
    %274 = vmatpush1.msra.mxu0 0.0
    %275 = vmatprep.subr.mxu0 0.0
    %276 = vmatpush1.msra.mxu0 0.0
    %277 = vmatprep.subr.mxu0 0.0
    %278 = vmatpush1.msra.mxu0 0.0
    %279 = vmatprep.subr.mxu0 0.0
    %280 = vmatpush1.msra.mxu0 0.0
    %281 = vmatprep.subr.mxu0 0.0
    %282 = vmatpush1.msra.mxu0 0.0
    %283 = vmatprep.subr.mxu0 0.0
    %284 = vmatpush1.msra.mxu0 0.0
    %285 = vmatprep.subr.mxu0 0.0
    %286 = vmatpush1.msra.mxu0 0.0
    %287 = vmatprep.subr.mxu0 0.0
    %288 = vmatpush1.msra.mxu0 0.0
    %289 = vmatprep.subr.mxu0 0.0
    %290 = vmatpush1.msra.mxu0 0.0
    %291 = vmatprep.subr.mxu0 0.0
    %292 = vmatpush1.msra.mxu0 0.0
    %293 = vmatprep.subr.mxu0 0.0
    %294 = vmatpush1.msra.mxu0 0.0
    %295 = vmatprep.subr.mxu0 0.0
    %296 = vmatpush1.msra.mxu0 0.0
    %297 = vmatprep.subr.mxu0 0.0
    %298 = vmatpush1.msra.mxu0 0.0
    %299 = vmatprep.subr.mxu0 0.0
    %300 = vmatpush1.msra.mxu0 0.0
    %301 = vmatprep.subr.mxu0 0.0
    %302 = vmatpush1.msra.mxu0 0.0
    %303 = vmatprep.subr.mxu0 0.0
    %304 = vmatpush1.msra.mxu0 0.0
    %305 = vmatprep.subr.mxu0 0.0
    %306 = vmatpush1.msra.mxu0 0.0
    %307 = vmatprep.subr.mxu0 0.0
    %308 = vmatpush1.msra.mxu0 0.0
    %309 = vmatprep.subr.mxu0 0.0
    %310 = vmatpush1.msra.mxu0 0.0
    %311 = vmatprep.subr.mxu0 0.0
    %312 = vmatpush1.msra.mxu0 0.0
    %313 = vmatprep.mubr.f32.mxu0 0.0
    %314 = vmatmul.mubr.f32.gmra.mrb[0].mxu0 %v247
    %v315 = vpop.f32.mrb[0].mxu0
    %v316 = vadd.f32 %v243, %v315
    %v317 = vpop.f32.mrb[0].mxu0
    %318 = vdwg.mxu0
    %v319 = vld [vmem:[%s6] sm:$0x1]
    %v320 = vld [vmem:[%s7] sm:$0x1]
    %vm321 = vcmask 517120
    %v322 = vsel %vm321, %v316, 0.0
    %v323 = vrot.slane %v322, 4
    %v324 = vadd.f32 %v322, %v323
    %v325 = vrot.slane %v324, 2
    %v326 = vadd.f32 %v324, %v325
    %v327 = vrot.slane %v326, 1
    %v328 = vadd.f32 %v326, %v327
    %v329 = vmul.f32 %v328, %v198
    %v330 = vsub.f32 %v316, %v329
    %v331 = vmul.f32 %v330, %v330
    %v332 = vsel %vm321, %v331, 0.0
    %v333 = vrot.slane %v332, 4
    %v334 = vadd.f32 %v332, %v333
    %v335 = vrot.slane %v334, 2
    %v336 = vadd.f32 %v334, %v335
    %v337 = vrot.slane %v336, 1
    %v338 = vadd.f32 %v336, %v337
    %v339 = vmul.f32 %v338, %v198
    %v340 = vadd.f32 %v339, 1e-05
    %v341 = vrsqrt.pop %v340
    %v342 = vmul.f32 %v330, %v341
    %v344 = vlaneseq
    %v345 = vshrl.u32 %v344, 7
    %v346 = vsub.s32 0, %v345
    %v347 = vrot.slane %v319, %v346
    %v349 = vmul.f32 %v342, %v347
    %v351 = vlaneseq
    %v352 = vshrl.u32 %v351, 7
    %v353 = vsub.s32 0, %v352
    %v354 = vrot.slane %v320, %v353
    %v356 = vadd.f32 %v349, %v354
    %v357 = vsub.f32 0.0, %v356
    %v358 = vmul.f32 %v357, 1.442695
    %v359 = vpow.pop %v358
    %v360 = vadd.f32 %v359, 1.0
    %v361 = vrcp.pop %v360
    %v362 = vmul.f32 1.0, %v361
    %v363 = vmul.f32 %v356, %v362
    %v364 = vld [vmem:[#allocation7] sm:$0xff]
    %v365 = vld [vmem:[#allocation7 + $0x8] sm:$0xff]
    %v366 = vld [vmem:[#allocation7 + $0x10] sm:$0xff]
    %v367 = vld [vmem:[#allocation7 + $0x18] sm:$0xff]
    %v368 = vld [vmem:[#allocation7 + $0x20] sm:$0xff]
    %v369 = vld [vmem:[#allocation7 + $0x28] sm:$0xff]
    %v370 = vld [vmem:[#allocation7 + $0x30] sm:$0xff]
    %v371 = vld [vmem:[#allocation7 + $0x38] sm:$0xff]
    %v372 = vld [vmem:[%s9] sm:$0x1]
    %v374 = vlaneseq
    %v375 = vshrl.u32 %v374, 7
    %v376 = vsub.s32 0, %v375
    %v377 = vrot.slane %v372, %v376
    %vm379 = vcmask 523264
    %v381 = vsel %vm379, %v363, 0
    %383 = vmatprep.subr.mxu0 0.0
    %384 = vmatpush1.msra.mxu0 %v364
    %385 = vmatprep.subr.mxu0 0.0
    %386 = vmatpush1.msra.mxu0 %v365
    %387 = vmatprep.subr.mxu0 0.0
    %388 = vmatpush1.msra.mxu0 %v366
    %389 = vmatprep.subr.mxu0 0.0
    %390 = vmatpush1.msra.mxu0 %v367
    %391 = vmatprep.subr.mxu0 0.0
    %392 = vmatpush1.msra.mxu0 %v368
    %393 = vmatprep.subr.mxu0 0.0
    %394 = vmatpush1.msra.mxu0 %v369
    %395 = vmatprep.subr.mxu0 0.0
    %396 = vmatpush1.msra.mxu0 %v370
    %397 = vmatprep.subr.mxu0 0.0
    %398 = vmatpush1.msra.mxu0 %v371
    %399 = vmatprep.subr.mxu0 0.0
    %400 = vmatpush1.msra.mxu0 0.0
    %401 = vmatprep.subr.mxu0 0.0
    %402 = vmatpush1.msra.mxu0 0.0
    %403 = vmatprep.subr.mxu0 0.0
    %404 = vmatpush1.msra.mxu0 0.0
    %405 = vmatprep.subr.mxu0 0.0
    %406 = vmatpush1.msra.mxu0 0.0
    %407 = vmatprep.subr.mxu0 0.0
    %408 = vmatpush1.msra.mxu0 0.0
    %409 = vmatprep.subr.mxu0 0.0
    %410 = vmatpush1.msra.mxu0 0.0
    %411 = vmatprep.subr.mxu0 0.0
    %412 = vmatpush1.msra.mxu0 0.0
    %413 = vmatprep.subr.mxu0 0.0
    %414 = vmatpush1.msra.mxu0 0.0
    %415 = vmatprep.subr.mxu0 0.0
    %416 = vmatpush1.msra.mxu0 0.0
    %417 = vmatprep.subr.mxu0 0.0
    %418 = vmatpush1.msra.mxu0 0.0
    %419 = vmatprep.subr.mxu0 0.0
    %420 = vmatpush1.msra.mxu0 0.0
    %421 = vmatprep.subr.mxu0 0.0
    %422 = vmatpush1.msra.mxu0 0.0
    %423 = vmatprep.subr.mxu0 0.0
    %424 = vmatpush1.msra.mxu0 0.0
    %425 = vmatprep.subr.mxu0 0.0
    %426 = vmatpush1.msra.mxu0 0.0
    %427 = vmatprep.subr.mxu0 0.0
    %428 = vmatpush1.msra.mxu0 0.0
    %429 = vmatprep.subr.mxu0 0.0
    %430 = vmatpush1.msra.mxu0 0.0
    %431 = vmatprep.subr.mxu0 0.0
    %432 = vmatpush1.msra.mxu0 0.0
    %433 = vmatprep.subr.mxu0 0.0
    %434 = vmatpush1.msra.mxu0 0.0
    %435 = vmatprep.subr.mxu0 0.0
    %436 = vmatpush1.msra.mxu0 0.0
    %437 = vmatprep.subr.mxu0 0.0
    %438 = vmatpush1.msra.mxu0 0.0
    %439 = vmatprep.subr.mxu0 0.0
    %440 = vmatpush1.msra.mxu0 0.0
    %441 = vmatprep.subr.mxu0 0.0
    %442 = vmatpush1.msra.mxu0 0.0
    %443 = vmatprep.subr.mxu0 0.0
    %444 = vmatpush1.msra.mxu0 0.0
    %445 = vmatprep.subr.mxu0 0.0
    %446 = vmatpush1.msra.mxu0 0.0
    %447 = vmatprep.mubr.f32.mxu0 0.0
    %448 = vmatmul.mubr.f32.gmra.mrb[0].mxu0 %v381
    %v449 = vpop.f32.mrb[0].mxu0
    %v450 = vadd.f32 %v377, %v449
    %v451 = vpop.f32.mrb[0].mxu0
    %452 = vdwg.mxu0
    %v453 = vld [vmem:[%s10] sm:$0x1]
    %v454 = vld [vmem:[%s11] sm:$0x1]
    %v455 = vsel %vm321, %v450, 0.0
    %v456 = vrot.slane %v455, 4
    %v457 = vadd.f32 %v455, %v456
    %v458 = vrot.slane %v457, 2
    %v459 = vadd.f32 %v457, %v458
    %v460 = vrot.slane %v459, 1
    %v461 = vadd.f32 %v459, %v460
    %v462 = vmul.f32 %v461, %v198
    %v463 = vsub.f32 %v450, %v462
    %v464 = vmul.f32 %v463, %v463
    %v465 = vsel %vm321, %v464, 0.0
    %v466 = vrot.slane %v465, 4
    %v467 = vadd.f32 %v465, %v466
    %v468 = vrot.slane %v467, 2
    %v469 = vadd.f32 %v467, %v468
    %v470 = vrot.slane %v469, 1
    %v471 = vadd.f32 %v469, %v470
    %v472 = vmul.f32 %v471, %v198
    %v473 = vadd.f32 %v472, 1e-05
    %v474 = vrsqrt.pop %v473
    %v475 = vmul.f32 %v463, %v474
    %v477 = vlaneseq
    %v478 = vshrl.u32 %v477, 7
    %v479 = vsub.s32 0, %v478
    %v480 = vrot.slane %v453, %v479
    %v482 = vmul.f32 %v475, %v480
    %v484 = vlaneseq
    %v485 = vshrl.u32 %v484, 7
    %v486 = vsub.s32 0, %v485
    %v487 = vrot.slane %v454, %v486
    %v489 = vadd.f32 %v482, %v487
    %v490 = vsub.f32 0.0, %v489
    %v491 = vmul.f32 %v490, 1.442695
    %v492 = vpow.pop %v491
    %v493 = vadd.f32 %v492, 1.0
    %v494 = vrcp.pop %v493
    %v495 = vmul.f32 1.0, %v494
    %v496 = vmul.f32 %v489, %v495
    %v497 = vld [vmem:[#allocation8] sm:$0xff]
    %v498 = vld [vmem:[#allocation8 + $0x8] sm:$0xff]
    %v499 = vld [vmem:[#allocation8 + $0x10] sm:$0xff]
    %v500 = vld [vmem:[#allocation8 + $0x18] sm:$0xff]
    %v501 = vld [vmem:[#allocation8 + $0x20] sm:$0xff]
    %v502 = vld [vmem:[#allocation8 + $0x28] sm:$0xff]
    %v503 = vld [vmem:[#allocation8 + $0x30] sm:$0xff]
    %v504 = vld [vmem:[#allocation8 + $0x38] sm:$0xff]
    %v505 = vld [vmem:[#allocation8 + $0x40] sm:$0xff]
    %v506 = vld [vmem:[#allocation8 + $0x48] sm:$0xff]
    %v507 = vld [vmem:[#allocation8 + $0x50] sm:$0xff]
    %v508 = vld [vmem:[#allocation8 + $0x58] sm:$0xff]
    %v509 = vld [vmem:[#allocation8 + $0x60] sm:$0xff]
    %v510 = vld [vmem:[#allocation8 + $0x68] sm:$0xff]
    %v511 = vld [vmem:[#allocation8 + $0x70] sm:$0xff]
    %v512 = vld [vmem:[#allocation8 + $0x78] sm:$0xff]
    %v513 = vld [vmem:[#allocation8 + $0x80] sm:$0xff]
    %v514 = vld [vmem:[#allocation8 + $0x88] sm:$0xff]
    %v515 = vld [vmem:[#allocation8 + $0x90] sm:$0xff]
    %v516 = vld [vmem:[#allocation8 + $0x98] sm:$0xff]
    %v517 = vld [vmem:[#allocation8 + $0xa0] sm:$0xff]
    %v518 = vld [vmem:[#allocation8 + $0xa8] sm:$0xff]
    %v519 = vld [vmem:[#allocation8 + $0xb0] sm:$0xff]
    %v520 = vld [vmem:[#allocation8 + $0xb8] sm:$0xff]
    %v521 = vld [vmem:[#allocation8 + $0xc0] sm:$0xff]
    %v522 = vld [vmem:[#allocation8 + $0xc8] sm:$0xff]
    %v523 = vld [vmem:[#allocation8 + $0xd0] sm:$0xff]
    %v524 = vld [vmem:[#allocation8 + $0xd8] sm:$0xff]
    %v525 = vld [vmem:[#allocation8 + $0xe0] sm:$0xff]
    %v526 = vld [vmem:[#allocation8 + $0xe8] sm:$0xff]
    %v527 = vld [vmem:[#allocation8 + $0xf0] sm:$0xff]
    %v528 = vld [vmem:[#allocation8 + $0xf8] sm:$0xff]
    %v529 = vld [vmem:[#allocation8 + $0x100] sm:$0xff]
    %v530 = vld [vmem:[#allocation8 + $0x108] sm:$0xff]
    %v531 = vld [vmem:[#allocation8 + $0x110] sm:$0xff]
    %v532 = vld [vmem:[#allocation8 + $0x118] sm:$0xff]
    %v533 = vld [vmem:[#allocation8 + $0x120] sm:$0xff]
    %v534 = vld [vmem:[#allocation8 + $0x128] sm:$0xff]
    %v535 = vld [vmem:[#allocation8 + $0x130] sm:$0xff]
    %v536 = vld [vmem:[#allocation8 + $0x138] sm:$0xff]
    %v537 = vld [vmem:[#allocation8 + $0x140] sm:$0xff]
    %v538 = vld [vmem:[#allocation8 + $0x148] sm:$0xff]
    %v539 = vld [vmem:[#allocation8 + $0x150] sm:$0xff]
    %v540 = vld [vmem:[#allocation8 + $0x158] sm:$0xff]
    %v541 = vld [vmem:[#allocation8 + $0x160] sm:$0xff]
    %v542 = vld [vmem:[#allocation8 + $0x168] sm:$0xff]
    %v543 = vld [vmem:[#allocation8 + $0x170] sm:$0xff]
    %v544 = vld [vmem:[#allocation8 + $0x178] sm:$0xff]
    %v545 = vld [vmem:[#allocation8 + $0x180] sm:$0xff]
    %v546 = vld [vmem:[#allocation8 + $0x188] sm:$0xff]
    %v547 = vld [vmem:[#allocation8 + $0x190] sm:$0xff]
    %v548 = vld [vmem:[#allocation8 + $0x198] sm:$0xff]
    %v549 = vld [vmem:[#allocation8 + $0x1a0] sm:$0xff]
    %v550 = vld [vmem:[#allocation8 + $0x1a8] sm:$0xff]
    %v551 = vld [vmem:[#allocation8 + $0x1b0] sm:$0xff]
    %v552 = vld [vmem:[#allocation8 + $0x1b8] sm:$0xff]
    %v553 = vld [vmem:[#allocation8 + $0x1c0] sm:$0xff]
    %v554 = vld [vmem:[#allocation8 + $0x1c8] sm:$0xff]
    %v555 = vld [vmem:[#allocation8 + $0x1d0] sm:$0xff]
    %v556 = vld [vmem:[#allocation8 + $0x1d8] sm:$0xff]
    %v557 = vld [vmem:[#allocation8 + $0x1e0] sm:$0xff]
    %v558 = vld [vmem:[#allocation8 + $0x1e8] sm:$0xff]
    %v559 = vld [vmem:[#allocation8 + $0x1f0] sm:$0xff]
    %v560 = vld [vmem:[#allocation8 + $0x1f8] sm:$0xff]
    %v561 = vld [vmem:[%s13] sm:$0xff]
    %v563 = vlaneseq
    %v564 = vshrl.u32 %v563, 7
    %v565 = vsub.s32 0, %v564
    %v566 = vrot.slane %v561, %v565
    %v567 = vlaneseq
    %v568 = vshrl.u32 %v567, 7
    %v569 = vsub.s32 1, %v568
    %v570 = vrot.slane %v561, %v569
    %v571 = vlaneseq
    %v572 = vshrl.u32 %v571, 7
    %v573 = vsub.s32 2, %v572
    %v574 = vrot.slane %v561, %v573
    %v575 = vlaneseq
    %v576 = vshrl.u32 %v575, 7
    %v577 = vsub.s32 3, %v576
    %v578 = vrot.slane %v561, %v577
    %v579 = vlaneseq
    %v580 = vshrl.u32 %v579, 7
    %v581 = vsub.s32 4, %v580
    %v582 = vrot.slane %v561, %v581
    %v583 = vlaneseq
    %v584 = vshrl.u32 %v583, 7
    %v585 = vsub.s32 5, %v584
    %v586 = vrot.slane %v561, %v585
    %v587 = vlaneseq
    %v588 = vshrl.u32 %v587, 7
    %v589 = vsub.s32 6, %v588
    %v590 = vrot.slane %v561, %v589
    %v591 = vlaneseq
    %v592 = vshrl.u32 %v591, 7
    %v593 = vsub.s32 7, %v592
    %v594 = vrot.slane %v561, %v593
    %v604 = vsel %vm379, %v496, 0
    %606 = vmatprep.subr.mxu0 %v498
    %607 = vmatpush1.msra.mxu0 %v497
    %608 = vmatprep.subr.mxu0 %v506
    %609 = vmatpush1.msra.mxu0 %v505
    %610 = vmatprep.subr.mxu0 %v514
    %611 = vmatpush1.msra.mxu0 %v513
    %612 = vmatprep.subr.mxu0 %v522
    %613 = vmatpush1.msra.mxu0 %v521
    %614 = vmatprep.subr.mxu0 %v530
    %615 = vmatpush1.msra.mxu0 %v529
    %616 = vmatprep.subr.mxu0 %v538
    %617 = vmatpush1.msra.mxu0 %v537
    %618 = vmatprep.subr.mxu0 %v546
    %619 = vmatpush1.msra.mxu0 %v545
    %620 = vmatprep.subr.mxu0 %v554
    %621 = vmatpush1.msra.mxu0 %v553
    %622 = vmatprep.subr.mxu0 0.0
    %623 = vmatpush1.msra.mxu0 0.0
    %624 = vmatprep.subr.mxu0 0.0
    %625 = vmatpush1.msra.mxu0 0.0
    %626 = vmatprep.subr.mxu0 0.0
    %627 = vmatpush1.msra.mxu0 0.0
    %628 = vmatprep.subr.mxu0 0.0
    %629 = vmatpush1.msra.mxu0 0.0
    %630 = vmatprep.subr.mxu0 0.0
    %631 = vmatpush1.msra.mxu0 0.0
    %632 = vmatprep.subr.mxu0 0.0
    %633 = vmatpush1.msra.mxu0 0.0
    %634 = vmatprep.subr.mxu0 0.0
    %635 = vmatpush1.msra.mxu0 0.0
    %636 = vmatprep.subr.mxu0 0.0
    %637 = vmatpush1.msra.mxu0 0.0
    %638 = vmatprep.subr.mxu0 0.0
    %639 = vmatpush1.msra.mxu0 0.0
    %640 = vmatprep.subr.mxu0 0.0
    %641 = vmatpush1.msra.mxu0 0.0
    %642 = vmatprep.subr.mxu0 0.0
    %643 = vmatpush1.msra.mxu0 0.0
    %644 = vmatprep.subr.mxu0 0.0
    %645 = vmatpush1.msra.mxu0 0.0
    %646 = vmatprep.subr.mxu0 0.0
    %647 = vmatpush1.msra.mxu0 0.0
    %648 = vmatprep.subr.mxu0 0.0
    %649 = vmatpush1.msra.mxu0 0.0
    %650 = vmatprep.subr.mxu0 0.0
    %651 = vmatpush1.msra.mxu0 0.0
    %652 = vmatprep.subr.mxu0 0.0
    %653 = vmatpush1.msra.mxu0 0.0
    %654 = vmatprep.subr.mxu0 0.0
    %655 = vmatpush1.msra.mxu0 0.0
    %656 = vmatprep.subr.mxu0 0.0
    %657 = vmatpush1.msra.mxu0 0.0
    %658 = vmatprep.subr.mxu0 0.0
    %659 = vmatpush1.msra.mxu0 0.0
    %660 = vmatprep.subr.mxu0 0.0
    %661 = vmatpush1.msra.mxu0 0.0
    %662 = vmatprep.subr.mxu0 0.0
    %663 = vmatpush1.msra.mxu0 0.0
    %664 = vmatprep.subr.mxu0 0.0
    %665 = vmatpush1.msra.mxu0 0.0
    %666 = vmatprep.subr.mxu0 0.0
    %667 = vmatpush1.msra.mxu0 0.0
    %668 = vmatprep.subr.mxu0 0.0
    %669 = vmatpush1.msra.mxu0 0.0
    %670 = vmatprep.mubr.f32.mxu0 0.0
    %671 = vmatmul.mubr.f32.gmra.mrb[0].mxu0 %v604
    %v672 = vpop.f32.mrb[0].mxu0
    %v673 = vadd.f32 %v566, %v672
    %v674 = vpop.f32.mrb[0].mxu0
    %v675 = vadd.f32 %v570, %v674
    %676 = vdwg.mxu0
    %677 = vmatprep.subr.mxu0 %v500
    %678 = vmatpush1.msra.mxu0 %v499
    %679 = vmatprep.subr.mxu0 %v508
    %680 = vmatpush1.msra.mxu0 %v507
    %681 = vmatprep.subr.mxu0 %v516
    %682 = vmatpush1.msra.mxu0 %v515
    %683 = vmatprep.subr.mxu0 %v524
    %684 = vmatpush1.msra.mxu0 %v523
    %685 = vmatprep.subr.mxu0 %v532
    %686 = vmatpush1.msra.mxu0 %v531
    %687 = vmatprep.subr.mxu0 %v540
    %688 = vmatpush1.msra.mxu0 %v539
    %689 = vmatprep.subr.mxu0 %v548
    %690 = vmatpush1.msra.mxu0 %v547
    %691 = vmatprep.subr.mxu0 %v556
    %692 = vmatpush1.msra.mxu0 %v555
    %693 = vmatprep.subr.mxu0 0.0
    %694 = vmatpush1.msra.mxu0 0.0
    %695 = vmatprep.subr.mxu0 0.0
    %696 = vmatpush1.msra.mxu0 0.0
    %697 = vmatprep.subr.mxu0 0.0
    %698 = vmatpush1.msra.mxu0 0.0
    %699 = vmatprep.subr.mxu0 0.0
    %700 = vmatpush1.msra.mxu0 0.0
    %701 = vmatprep.subr.mxu0 0.0
    %702 = vmatpush1.msra.mxu0 0.0
    %703 = vmatprep.subr.mxu0 0.0
    %704 = vmatpush1.msra.mxu0 0.0
    %705 = vmatprep.subr.mxu0 0.0
    %706 = vmatpush1.msra.mxu0 0.0
    %707 = vmatprep.subr.mxu0 0.0
    %708 = vmatpush1.msra.mxu0 0.0
    %709 = vmatprep.subr.mxu0 0.0
    %710 = vmatpush1.msra.mxu0 0.0
    %711 = vmatprep.subr.mxu0 0.0
    %712 = vmatpush1.msra.mxu0 0.0
    %713 = vmatprep.subr.mxu0 0.0
    %714 = vmatpush1.msra.mxu0 0.0
    %715 = vmatprep.subr.mxu0 0.0
    %716 = vmatpush1.msra.mxu0 0.0
    %717 = vmatprep.subr.mxu0 0.0
    %718 = vmatpush1.msra.mxu0 0.0
    %719 = vmatprep.subr.mxu0 0.0
    %720 = vmatpush1.msra.mxu0 0.0
    %721 = vmatprep.subr.mxu0 0.0
    %722 = vmatpush1.msra.mxu0 0.0
    %723 = vmatprep.subr.mxu0 0.0
    %724 = vmatpush1.msra.mxu0 0.0
    %725 = vmatprep.subr.mxu0 0.0
    %726 = vmatpush1.msra.mxu0 0.0
    %727 = vmatprep.subr.mxu0 0.0
    %728 = vmatpush1.msra.mxu0 0.0
    %729 = vmatprep.subr.mxu0 0.0
    %730 = vmatpush1.msra.mxu0 0.0
    %731 = vmatprep.subr.mxu0 0.0
    %732 = vmatpush1.msra.mxu0 0.0
    %733 = vmatprep.subr.mxu0 0.0
    %734 = vmatpush1.msra.mxu0 0.0
    %735 = vmatprep.subr.mxu0 0.0
    %736 = vmatpush1.msra.mxu0 0.0
    %737 = vmatprep.subr.mxu0 0.0
    %738 = vmatpush1.msra.mxu0 0.0
    %739 = vmatprep.subr.mxu0 0.0
    %740 = vmatpush1.msra.mxu0 0.0
    %741 = vmatprep.mubr.f32.mxu0 0.0
    %742 = vmatmul.mubr.f32.gmra.mrb[0].mxu0 %v604
    %v743 = vpop.f32.mrb[0].mxu0
    %v744 = vadd.f32 %v574, %v743
    %v745 = vpop.f32.mrb[0].mxu0
    %v746 = vadd.f32 %v578, %v745
    %747 = vdwg.mxu0
    %748 = vmatprep.subr.mxu0 %v502
    %749 = vmatpush1.msra.mxu0 %v501
    %750 = vmatprep.subr.mxu0 %v510
    %751 = vmatpush1.msra.mxu0 %v509
    %752 = vmatprep.subr.mxu0 %v518
    %753 = vmatpush1.msra.mxu0 %v517
    %754 = vmatprep.subr.mxu0 %v526
    %755 = vmatpush1.msra.mxu0 %v525
    %756 = vmatprep.subr.mxu0 %v534
    %757 = vmatpush1.msra.mxu0 %v533
    %758 = vmatprep.subr.mxu0 %v542
    %759 = vmatpush1.msra.mxu0 %v541
    %760 = vmatprep.subr.mxu0 %v550
    %761 = vmatpush1.msra.mxu0 %v549
    %762 = vmatprep.subr.mxu0 %v558
    %763 = vmatpush1.msra.mxu0 %v557
    %764 = vmatprep.subr.mxu0 0.0
    %765 = vmatpush1.msra.mxu0 0.0
    %766 = vmatprep.subr.mxu0 0.0
    %767 = vmatpush1.msra.mxu0 0.0
    %768 = vmatprep.subr.mxu0 0.0
    %769 = vmatpush1.msra.mxu0 0.0
    %770 = vmatprep.subr.mxu0 0.0
    %771 = vmatpush1.msra.mxu0 0.0
    %772 = vmatprep.subr.mxu0 0.0
    %773 = vmatpush1.msra.mxu0 0.0
    %774 = vmatprep.subr.mxu0 0.0
    %775 = vmatpush1.msra.mxu0 0.0
    %776 = vmatprep.subr.mxu0 0.0
    %777 = vmatpush1.msra.mxu0 0.0
    %778 = vmatprep.subr.mxu0 0.0
    %779 = vmatpush1.msra.mxu0 0.0
    %780 = vmatprep.subr.mxu0 0.0
    %781 = vmatpush1.msra.mxu0 0.0
    %782 = vmatprep.subr.mxu0 0.0
    %783 = vmatpush1.msra.mxu0 0.0
    %784 = vmatprep.subr.mxu0 0.0
    %785 = vmatpush1.msra.mxu0 0.0
    %786 = vmatprep.subr.mxu0 0.0
    %787 = vmatpush1.msra.mxu0 0.0
    %788 = vmatprep.subr.mxu0 0.0
    %789 = vmatpush1.msra.mxu0 0.0
    %790 = vmatprep.subr.mxu0 0.0
    %791 = vmatpush1.msra.mxu0 0.0
    %792 = vmatprep.subr.mxu0 0.0
    %793 = vmatpush1.msra.mxu0 0.0
    %794 = vmatprep.subr.mxu0 0.0
    %795 = vmatpush1.msra.mxu0 0.0
    %796 = vmatprep.subr.mxu0 0.0
    %797 = vmatpush1.msra.mxu0 0.0
    %798 = vmatprep.subr.mxu0 0.0
    %799 = vmatpush1.msra.mxu0 0.0
    %800 = vmatprep.subr.mxu0 0.0
    %801 = vmatpush1.msra.mxu0 0.0
    %802 = vmatprep.subr.mxu0 0.0
    %803 = vmatpush1.msra.mxu0 0.0
    %804 = vmatprep.subr.mxu0 0.0
    %805 = vmatpush1.msra.mxu0 0.0
    %806 = vmatprep.subr.mxu0 0.0
    %807 = vmatpush1.msra.mxu0 0.0
    %808 = vmatprep.subr.mxu0 0.0
    %809 = vmatpush1.msra.mxu0 0.0
    %810 = vmatprep.subr.mxu0 0.0
    %811 = vmatpush1.msra.mxu0 0.0
    %812 = vmatprep.mubr.f32.mxu0 0.0
    %813 = vmatmul.mubr.f32.gmra.mrb[0].mxu0 %v604
    %v814 = vpop.f32.mrb[0].mxu0
    %v815 = vadd.f32 %v582, %v814
    %v816 = vpop.f32.mrb[0].mxu0
    %v817 = vadd.f32 %v586, %v816
    %818 = vdwg.mxu0
    %819 = vmatprep.subr.mxu0 %v504
    %820 = vmatpush1.msra.mxu0 %v503
    %821 = vmatprep.subr.mxu0 %v512
    %822 = vmatpush1.msra.mxu0 %v511
    %823 = vmatprep.subr.mxu0 %v520
    %824 = vmatpush1.msra.mxu0 %v519
    %825 = vmatprep.subr.mxu0 %v528
    %826 = vmatpush1.msra.mxu0 %v527
    %827 = vmatprep.subr.mxu0 %v536
    %828 = vmatpush1.msra.mxu0 %v535
    %829 = vmatprep.subr.mxu0 %v544
    %830 = vmatpush1.msra.mxu0 %v543
    %831 = vmatprep.subr.mxu0 %v552
    %832 = vmatpush1.msra.mxu0 %v551
    %833 = vmatprep.subr.mxu0 %v560
    %834 = vmatpush1.msra.mxu0 %v559
    %835 = vmatprep.subr.mxu0 0.0
    %836 = vmatpush1.msra.mxu0 0.0
    %837 = vmatprep.subr.mxu0 0.0
    %838 = vmatpush1.msra.mxu0 0.0
    %839 = vmatprep.subr.mxu0 0.0
    %840 = vmatpush1.msra.mxu0 0.0
    %841 = vmatprep.subr.mxu0 0.0
    %842 = vmatpush1.msra.mxu0 0.0
    %843 = vmatprep.subr.mxu0 0.0
    %844 = vmatpush1.msra.mxu0 0.0
    %845 = vmatprep.subr.mxu0 0.0
    %846 = vmatpush1.msra.mxu0 0.0
    %847 = vmatprep.subr.mxu0 0.0
    %848 = vmatpush1.msra.mxu0 0.0
    %849 = vmatprep.subr.mxu0 0.0
    %850 = vmatpush1.msra.mxu0 0.0
    %851 = vmatprep.subr.mxu0 0.0
    %852 = vmatpush1.msra.mxu0 0.0
    %853 = vmatprep.subr.mxu0 0.0
    %854 = vmatpush1.msra.mxu0 0.0
    %855 = vmatprep.subr.mxu0 0.0
    %856 = vmatpush1.msra.mxu0 0.0
    %857 = vmatprep.subr.mxu0 0.0
    %858 = vmatpush1.msra.mxu0 0.0
    %859 = vmatprep.subr.mxu0 0.0
    %860 = vmatpush1.msra.mxu0 0.0
    %861 = vmatprep.subr.mxu0 0.0
    %862 = vmatpush1.msra.mxu0 0.0
    %863 = vmatprep.subr.mxu0 0.0
    %864 = vmatpush1.msra.mxu0 0.0
    %865 = vmatprep.subr.mxu0 0.0
    %866 = vmatpush1.msra.mxu0 0.0
    %867 = vmatprep.subr.mxu0 0.0
    %868 = vmatpush1.msra.mxu0 0.0
    %869 = vmatprep.subr.mxu0 0.0
    %870 = vmatpush1.msra.mxu0 0.0
    %871 = vmatprep.subr.mxu0 0.0
    %872 = vmatpush1.msra.mxu0 0.0
    %873 = vmatprep.subr.mxu0 0.0
    %874 = vmatpush1.msra.mxu0 0.0
    %875 = vmatprep.subr.mxu0 0.0
    %876 = vmatpush1.msra.mxu0 0.0
    %877 = vmatprep.subr.mxu0 0.0
    %878 = vmatpush1.msra.mxu0 0.0
    %879 = vmatprep.subr.mxu0 0.0
    %880 = vmatpush1.msra.mxu0 0.0
    %881 = vmatprep.subr.mxu0 0.0
    %882 = vmatpush1.msra.mxu0 0.0
    %883 = vmatprep.mubr.f32.mxu0 0.0
    %884 = vmatmul.mubr.f32.gmra.mrb[0].mxu0 %v604
    %v885 = vpop.f32.mrb[0].mxu0
    %v886 = vadd.f32 %v590, %v885
    %v887 = vpop.f32.mrb[0].mxu0
    %v888 = vadd.f32 %v594, %v887
    %889 = vdwg.mxu0
    %v890 = vsub.f32 0.0, %v673
    %v891 = vsub.f32 0.0, %v675
    %v892 = vsub.f32 0.0, %v744
    %v893 = vsub.f32 0.0, %v746
    %v894 = vsub.f32 0.0, %v815
    %v895 = vsub.f32 0.0, %v817
    %v896 = vsub.f32 0.0, %v886
    %v897 = vsub.f32 0.0, %v888
    %v898 = vmul.f32 %v890, 1.442695
    %v899 = vpow.pop %v898
    %v900 = vmul.f32 %v891, 1.442695
    %v901 = vpow.pop %v900
    %v902 = vmul.f32 %v892, 1.442695
    %v903 = vpow.pop %v902
    %v904 = vmul.f32 %v893, 1.442695
    %v905 = vpow.pop %v904
    %v906 = vmul.f32 %v894, 1.442695
    %v907 = vpow.pop %v906
    %v908 = vmul.f32 %v895, 1.442695
    %v909 = vpow.pop %v908
    %v910 = vmul.f32 %v896, 1.442695
    %v911 = vpow.pop %v910
    %v912 = vmul.f32 %v897, 1.442695
    %v913 = vpow.pop %v912
    %v914 = vadd.f32 %v899, 1.0
    %v915 = vadd.f32 %v901, 1.0
    %v916 = vadd.f32 %v903, 1.0
    %v917 = vadd.f32 %v905, 1.0
    %v918 = vadd.f32 %v907, 1.0
    %v919 = vadd.f32 %v909, 1.0
    %v920 = vadd.f32 %v911, 1.0
    %v921 = vadd.f32 %v913, 1.0
    %v922 = vrcp.pop %v914
    %v923 = vmul.f32 1.0, %v922
    %v924 = vrcp.pop %v915
    %v925 = vmul.f32 1.0, %v924
    %v926 = vrcp.pop %v916
    %v927 = vmul.f32 1.0, %v926
    %v928 = vrcp.pop %v917
    %v929 = vmul.f32 1.0, %v928
    %v930 = vrcp.pop %v918
    %v931 = vmul.f32 1.0, %v930
    %v932 = vrcp.pop %v919
    %v933 = vmul.f32 1.0, %v932
    %v934 = vrcp.pop %v920
    %v935 = vmul.f32 1.0, %v934
    %v936 = vrcp.pop %v921
    %v937 = vmul.f32 1.0, %v936
    %v946 = vcombine.low %v923, %v925
    %v947 = vcombine.low %v927, %v929
    %v949 = vunpack.c.l.s4 1983009808
    %v950 = vunpack.c.0.s8 %v949
    %v951 = vlaneseq
    %v952 = vshrl.u32 %v951, 7
    %v953 = vsub.s32 %v950, %v952
    %v954 = vrot.slane %v946, %v953
    %v956 = vunpack.c.l.s4 1983009808
    %v957 = vunpack.c.0.s8 %v956
    %v958 = vlaneseq
    %v959 = vshrl.u32 %v958, 7
    %v960 = vsub.s32 %v957, %v959
    %v961 = vrot.slane %v947, %v960
    %v962 = vcombine.low %v954, %v961
    %v963 = vcombine.low %v931, %v933
    %v964 = vcombine.low %v935, %v937
    %v966 = vunpack.c.l.s4 1983009808
    %v967 = vunpack.c.0.s8 %v966
    %v968 = vlaneseq
    %v969 = vshrl.u32 %v968, 7
    %v970 = vsub.s32 %v967, %v969
    %v971 = vrot.slane %v963, %v970
    %v973 = vunpack.c.l.s4 1983009808
    %v974 = vunpack.c.0.s8 %v973
    %v975 = vlaneseq
    %v976 = vshrl.u32 %v975, 7
    %v977 = vsub.s32 %v974, %v976
    %v978 = vrot.slane %v964, %v977
    %v979 = vcombine.low %v971, %v978
    %982 = vst [vmem:[#allocation10] sm:$0xff] %v962
    %983 = vst [vmem:[#allocation10 + $0x8] sm:$0xff] %v979
    // Predicated region
    $region74: #{tpu_custom_call.1} parent=1 // pred_check
      _
    $region75: #{tpu_custom_call.1} parent=1 // pred_check_branch
      %985 = sbr.rel (0) target = $region77
    $region76: #{tpu_custom_call.1} parent=1 // pred_region
      %s987 = ssub.s32 256, 256
      %988 = vsyncadd [#allocation4], %s987
      %s990 = sshll.u32 [#allocation10], 4
      %s991 = int_to_ptr.vmem [resolvable:$true] %s990
      %993 = dma.vmem_to_hbm [thread:$0]  %s991, 256, %s14, [#allocation4]
    $region77: #{tpu_custom_call.1} parent=1 // pred_fallthru
      _
    // Predicated region
    $region78: #{tpu_custom_call.1} parent=1 // pred_check
      _
    $region79: #{tpu_custom_call.1} parent=1 // pred_check_branch
      %995 = sbr.rel (0) target = $region81
    $region80: #{tpu_custom_call.1} parent=1 // pred_region
      %996 = dma.done [#allocation4], 256
    $region81: #{tpu_custom_call.1} parent=1 // pred_fallthru
      _
    %997 = vsyncpa [#allocation3], 1
    %998 = vsyncpa [#allocation6], 1
    %999 = vsyncpa [#allocation9], 1
    %1000 = vsyncpa [#allocation4], 1

</llo_original>
